<compile_context>
chip_gen: v7x
topology: tpu7x:2x2x1
jax: 0.10.0
libtpu: 0.0.40
codegen_flags: <defaults>
</compile_context>

<pallas_src>
import math

import jax
import jax.numpy as jnp
from jax import lax
from jax.experimental import pallas as pl
from jax.experimental.pallas import tpu as pltpu


def _round_up(x, m):
    return ((x + m - 1) // m) * m


def _vmem_budget_and_limit():
    """(slab budget, scoped vmem_limit_bytes) derived from the chip generation."""
    try:
        cap = int(pltpu.get_tpu_info().vmem_capacity_bytes)
    except Exception:
        cap = 0
    try:
        kind = jax.devices()[0].device_kind.lower()
    except Exception:
        kind = ""
    if cap <= 0:
        cap = 64 * 1024 * 1024          # conservative fallback (v7x-sized)
    if "v7" in kind:
        cap = min(cap, 64 * 1024 * 1024)  # v7x: 64 MiB per TensorCore
    budget = cap // 3                    # ~42 MiB on v5e/v6e, ~21 MiB on v7x
    limit = min((cap * 3) // 4, cap - 4 * 1024 * 1024)
    return budget, int(limit)


def _leading_axis_semantics(n_lead):
    """Core-shard the leading (h) grid axis on multi-TensorCore chips (v7x)."""
    try:
        kind = jax.devices()[0].device_kind.lower()
        if "v7" in kind and n_lead >= 2 and n_lead % 2 == 0:
            return pltpu.CORE_PARALLEL
    except Exception:
        pass
    return pltpu.PARALLEL


def _choose_tiles(S, B, H, in_dtype, out_dtype, budget, max_ts=None):
    """Pick (TS, TH, SUB): set-axis chunk, H tile, and cast+add sub-chunk height."""
    in_isz = jnp.dtype(in_dtype).itemsize
    out_isz = jnp.dtype(out_dtype).itemsize
    # Sublane packing: a (rows, 128) VMEM tile holds 8 f32 / 16 bf16 / 32 int8 rows.
    in_pack, out_pack = max(8, 32 // in_isz), max(8, 32 // out_isz)
    B_in, B_f32, B_out = _round_up(B, in_pack), _round_up(B, 8), _round_up(B, out_pack)

    # ---- H tile (lane axis): multiple of 128, or the full H.  Split once so
    # the leading grid axis has >= 2 blocks (v7x core sharding), then halve
    # while the f32 accumulator face exceeds ~2 MiB so TS never collapses.
    TH = H
    if H % 256 == 0:
        TH = H // 2
        while TH % 256 == 0 and TH > 512 and B_f32 * TH * 4 > 2 * 1024 * 1024:
            TH //= 2
    TH_pad = _round_up(TH, 128)

    # ---- fixed per-tile VMEM costs (padding-aware).
    acc_bytes = B_f32 * TH_pad * 4                 # f32 accumulator, single-buffered
    out_bytes = 2 * B_out * TH_pad * out_isz       # output tile, double-buffered
    face_bytes = B_in * TH_pad * in_isz            # one (B, TH) face of the input slab

    # ---- sub-chunk height for the cast(+mask)+add loop: bound the f32 temp.
    SUB = 8
    while SUB > 1 and SUB * B_f32 * TH_pad * 4 > 2 * 1024 * 1024:
        SUB //= 2
    tmp_bytes = SUB * B_f32 * TH_pad * 4

    # ---- set-axis chunk: biggest double-buffered input slab within the budget.
    avail = budget - acc_bytes - out_bytes - tmp_bytes
    ts = (avail // (2 * face_bytes)) // SUB * SUB if avail > 0 else 0
    ts = max(SUB, ts)
    ts = min(ts, _round_up(S, SUB))
    if max_ts is not None:
        ts = max(1, min(ts, int(max_ts)))
    if ts % SUB != 0:                              # only when max_ts forces an odd TS
        SUB = ts if ts <= 8 else math.gcd(ts, 8)
    return int(ts), int(TH), int(SUB)


def _make_kernel(S_total, TS, SUB, use_scratch):
    n_sub = TS // SUB
    has_tail = (S_total % TS) != 0

    def kernel(x_ref, o_ref, *scratch):
        # f32 output: accumulate directly into o_ref (resident across the
        # reduction axis).  Otherwise accumulate into the f32 scratch.
        acc_ref = scratch[0] if use_scratch else o_ref
        s = pl.program_id(1)
        n_s = pl.num_programs(1)

        @pl.when(s == 0)
        def _init():
            acc_ref[...] = jnp.zeros_like(acc_ref)

        def add_sub(i, masked):
            r0 = i * SUB
            if not isinstance(i, int):
                r0 = pl.multiple_of(r0, SUB)
            chunk = x_ref[pl.ds(r0, SUB)].astype(jnp.float32)  # (SUB, B, TH) f32 temp
            if masked:
                row = lax.broadcasted_iota(jnp.int32, chunk.shape, 0)
                chunk = jnp.where(s * TS + r0 + row < S_total, chunk, 0.0)
            acc_ref[...] += jnp.sum(chunk, axis=0)

        def accumulate(masked):
            if n_sub == 1:
                add_sub(0, masked)
            else:
                def body(i, carry):
                    add_sub(i, masked)
                    return carry
                lax.fori_loop(0, n_sub, body, 0)

        if has_tail:
            # Mask only on the last reduction step: every other step takes the
            # plain cast+add fast path (keeps v7x HBM-bound, not VALU-bound).
            @pl.when(s < n_s - 1)
            def _fast():
                accumulate(False)

            @pl.when(s == n_s - 1)
            def _tail():
                accumulate(True)
        else:
            accumulate(False)

        @pl.when(s == n_s - 1)
        def _finalize():
            inv_n = jnp.float32(1.0 / S_total)  # divide by true S, not padded S
            o_ref[...] = (acc_ref[...] * inv_n).astype(o_ref.dtype)

    return kernel


def aggregate_mean(x, *, max_ts=None):
    """Permutation- and count-invariant mean over axis 0.  (S, B, H) -> (B, H)."""
    S, B, H = x.shape
    out_dtype = x.dtype
    budget, vmem_limit = _vmem_budget_and_limit()
    TS, TH, SUB = _choose_tiles(S, B, H, x.dtype, out_dtype, budget, max_ts=max_ts)
    n_s = pl.cdiv(S, TS)
    n_h = H // TH

    use_scratch = jnp.dtype(out_dtype) != jnp.dtype(jnp.float32)
    scratch_shapes = [pltpu.VMEM((B, TH), jnp.float32)] if use_scratch else []

    return pl.pallas_call(
        _make_kernel(S, TS, SUB, use_scratch),
        out_shape=jax.ShapeDtypeStruct((B, H), out_dtype),
        grid=(n_h, n_s),  # reduction axis last
        in_specs=[pl.BlockSpec((TS, B, TH), lambda h, s: (s, 0, h))],
        out_specs=pl.BlockSpec((B, TH), lambda h, s: (0, h)),
        scratch_shapes=scratch_shapes,
        compiler_params=pltpu.CompilerParams(
            dimension_semantics=(_leading_axis_semantics(n_h), pltpu.ARBITRARY),
            vmem_limit_bytes=vmem_limit,
        ),
    )(x)


class Aggregator:
    """JAX/Pallas counterpart of the PyTorch Aggregator base class."""

    def __init__(self, type=None):
        self._type = type

    @property
    def type(self):
        return self._type

    def __call__(self, x):
        # Canonical permutation-invariant aggregation over the set axis.
        return aggregate_mean(x)


if __name__ == "__main__":
    key = jax.random.PRNGKey(0)
    S, B, H = 8, 16, 128  # small shapes; (B, H) aligned to the (8, 128) vreg tile
    x = jax.random.normal(key, (S, B, H), dtype=jnp.float32)

    agg = Aggregator(type="mean")
    out = jax.block_until_ready(agg(x))

    ref = jnp.mean(x, axis=0)
    assert out.shape == (B, H)
    assert jnp.allclose(out, ref, atol=1e-5, rtol=1e-5)

    # Permutation invariance.
    perm = jax.random.permutation(jax.random.PRNGKey(1), S)
    out_perm = jax.block_until_ready(agg(x[perm]))
    assert jnp.allclose(out, out_perm, atol=1e-5, rtol=1e-5)

    # Tail-masking path: force TS=3 so S=8 splits into 3 blocks (gated tail mask).
    out_tail = jax.block_until_ready(aggregate_mean(x, max_ts=3))
    assert jnp.allclose(out_tail, ref, atol=1e-5, rtol=1e-5)

    # bf16 input: narrow DMA + f32 scratch-accumulator path.
    x_bf = x.astype(jnp.bfloat16)
    out_bf = jax.block_until_ready(aggregate_mean(x_bf))
    ref_bf = jnp.mean(x_bf.astype(jnp.float32), axis=0)
    assert jnp.allclose(out_bf.astype(jnp.float32), ref_bf, atol=2e-2, rtol=2e-2)

    # Multi-h-tile + multi-step reduction with tail: exercises the H split,
    # the fori_loop sub-chunk path, and the gated-mask last step.
    S2, B2, H2 = 40, 16, 512
    x2 = jax.random.normal(jax.random.PRNGKey(2), (S2, B2, H2), dtype=jnp.float32)
    out2 = jax.block_until_ready(aggregate_mean(x2, max_ts=16))
    assert jnp.allclose(out2, jnp.mean(x2, axis=0), atol=1e-5, rtol=1e-5)

    print("KERNEL_OK")
</pallas_src>

<mosaic_0001>
module attributes {stable_mosaic.version = 11 : i64} {
  func.func @kernel(%arg0: i32, %arg1: i32, %arg2: memref<8x16x128xf32, #tpu.memory_space<vmem>>, %arg3: memref<16x128xf32, #tpu.memory_space<vmem>>) attributes {dimension_semantics = [#tpu.dimension_semantics<parallel>, #tpu.dimension_semantics<arbitrary>], iteration_bounds = array<i64: 1, 1>, scalar_prefetch = 0 : i64, scratch_operands = 0 : i64, tpu.core_type = #tpu.core_type<tc>, window_params = [{transform_indices = @transform_0, window_bounds = array<i64: 8, 16, 128>}, {transform_indices = @transform_1, window_bounds = array<i64: 16, 128>}]} {
    %c0_i32 = arith.constant 0 : i32
    %0 = arith.cmpi eq, %arg1, %c0_i32 : i32
    %1 = arith.extui %0 : i1 to i32
    %c0_i32_0 = arith.constant 0 : i32
    %2 = arith.cmpi ne, %1, %c0_i32_0 : i32
    scf.if %2 {
      %cst_9 = arith.constant 0.000000e+00 : f32
      %11 = vector.broadcast %cst_9 : f32 to vector<16x128xf32>
      %c0_10 = arith.constant 0 : index
      %c0_11 = arith.constant 0 : index
      %12 = vector.load %arg3[%c0_10, %c0_11] : memref<16x128xf32, #tpu.memory_space<vmem>>, vector<16x128xf32>
      tpu.vector_store %arg3[%c0_10, %c0_11], %11 {strides = array<i32>} : memref<16x128xf32, #tpu.memory_space<vmem>>, vector<16x128xf32>,
    } else {
    }
    %c0 = arith.constant 0 : index
    %c0_1 = arith.constant 0 : index
    %c0_2 = arith.constant 0 : index
    %3 = vector.load %arg2[%c0, %c0_1, %c0_2] : memref<8x16x128xf32, #tpu.memory_space<vmem>>, vector<8x16x128xf32>
    %c0_3 = arith.constant 0 : index
    %c0_4 = arith.constant 0 : index
    %4 = vector.load %arg3[%c0_3, %c0_4] : memref<16x128xf32, #tpu.memory_space<vmem>>, vector<16x128xf32>
    %cst = arith.constant dense<0.000000e+00> : vector<16x128xf32>
    %5 = vector.multi_reduction <add>, %3, %cst [0] : vector<8x16x128xf32> to vector<16x128xf32>
    %6 = arith.addf %4, %5 : vector<16x128xf32>
    %c0_5 = arith.constant 0 : index
    %c0_6 = arith.constant 0 : index
    %7 = vector.load %arg3[%c0_5, %c0_6] : memref<16x128xf32, #tpu.memory_space<vmem>>, vector<16x128xf32>
    tpu.vector_store %arg3[%c0_5, %c0_6], %6 {strides = array<i32>} : memref<16x128xf32, #tpu.memory_space<vmem>>, vector<16x128xf32>,
    %c0_i32_7 = arith.constant 0 : i32
    %8 = arith.cmpi eq, %arg1, %c0_i32_7 : i32
    %9 = arith.extui %8 : i1 to i32
    %c0_i32_8 = arith.constant 0 : i32
    %10 = arith.cmpi ne, %9, %c0_i32_8 : i32
    scf.if %10 {
      %c0_9 = arith.constant 0 : index
      %c0_10 = arith.constant 0 : index
      %11 = vector.load %arg3[%c0_9, %c0_10] : memref<16x128xf32, #tpu.memory_space<vmem>>, vector<16x128xf32>
      %cst_11 = arith.constant 1.250000e-01 : f32
      %12 = vector.broadcast %cst_11 : f32 to vector<16x128xf32>
      %13 = arith.mulf %11, %12 : vector<16x128xf32>
      %c0_12 = arith.constant 0 : index
      %c0_13 = arith.constant 0 : index
      %14 = vector.load %arg3[%c0_12, %c0_13] : memref<16x128xf32, #tpu.memory_space<vmem>>, vector<16x128xf32>
      tpu.vector_store %arg3[%c0_12, %c0_13], %13 {strides = array<i32>} : memref<16x128xf32, #tpu.memory_space<vmem>>, vector<16x128xf32>,
    } else {
    }
    return
  }
  func.func @transform_0(%arg0: i32, %arg1: i32) -> (i32, i32, i32) {
    %c0_i32 = arith.constant 0 : i32
    %c0_i32_0 = arith.constant 0 : i32
    return %arg1, %c0_i32, %arg0 : i32, i32, i32
  }
  func.func @transform_1(%arg0: i32, %arg1: i32) -> (i32, i32) {
    %c0_i32 = arith.constant 0 : i32
    %c0_i32_0 = arith.constant 0 : i32
    return %c0_i32, %arg0 : i32, i32
  }
}

</mosaic_0001>

<llo_original>
// kernel: tpu_custom_call.1
$region0: #{tpu_custom_call.1}
  #allocation0 [shape = 'u32[]', space=smem, size = 0x4, offset = 0x4, fixed_abs, tag = 'smem constant byte address 0x4 - core index']
  #allocation1 [shape = 'u32[144,128]{1,0:T(1,128)}', space=vmem, size = 0x12000, scoped, tag = 'internal scratch']
  %s0 = inlined_call_operand.hbm [shape: f32[8,16,128], index: 0, kind: input, shape index: {}]
  %s1 = inlined_call_operand.hbm [shape: f32[16,128], index: 1, kind: output, shape index: {}]
  %s2 = sld [smem:[#allocation0]]
  $region26: #{tpu_custom_call.1} parent=0
    _
  %s4 = ssub.s32 1, %s2
  %s5 = scalar_select 0, %s4, %s2
  $region1: #{tpu_custom_call.1} parent=0
    #allocation2 [shape = 'u8[65536]{0}', space=vmem, size = 0x10000, scoped, tag = 'input window, operand 0, single buffered']
    #allocation3 [shape = 's32[1]{0}', space=sflag, size = 0x4, scoped, tag = 'scoped memory for tpu_custom_call.1']
    #allocation4 [shape = 's32[1]{0}', space=sflag, size = 0x4, scoped, tag = 'scoped memory for tpu_custom_call.1']
    #allocation5 [shape = 'u8[8192]{0}', space=vmem, size = 0x2000, scoped, tag = 'output window, operand 0, single buffered']
    %6 = vsyncpa [#allocation3], 0
    %7 = vsyncpa [#allocation4], 0
    // Predicated region
    $region2: #{tpu_custom_call.1} parent=1 // pred_check
      _
    $region3: #{tpu_custom_call.1} parent=1 // pred_check_branch
      %9 = sbr.rel (0) target = $region5
    $region4: #{tpu_custom_call.1} parent=1 // pred_region
      %s11 = ssub.s32 2048, 2048
      %12 = vsyncadd [#allocation3], %s11
      %s13 = sshll.u32 [#allocation2], 4
      %s14 = int_to_ptr.vmem [resolvable:$true] %s13
      %19 = dma.hbm_to_vmem [thread:$0]  %s0, 2048, %s14, [#allocation3], 128, 128, 8
    $region5: #{tpu_custom_call.1} parent=1 // pred_fallthru
      _
    // Predicated region
    $region6: #{tpu_custom_call.1} parent=1 // pred_check
      _
    $region7: #{tpu_custom_call.1} parent=1 // pred_check_branch
      %21 = sbr.rel (0) target = $region9
    $region8: #{tpu_custom_call.1} parent=1 // pred_region
      %22 = dma.done [#allocation3], 2048
    $region9: #{tpu_custom_call.1} parent=1 // pred_fallthru
      _
    %p23 = scmp.eq.s32.totalorder 0, 0
    // Predicated region
    $region10: #{tpu_custom_call.1} parent=1 // pred_check
      %p24 = pneg %p23
    $region11: #{tpu_custom_call.1} parent=1 // pred_check_branch
      %26 = sbr.rel (%p24) target = $region13
    $region12: #{tpu_custom_call.1} parent=1 // pred_region
      %27 = vst [vmem:[#allocation5] sm:$0xff] 0.0
      %28 = vst [vmem:[#allocation5 + $0x8] sm:$0xff] 0.0
    $region13: #{tpu_custom_call.1} parent=1 // pred_fallthru
      _
    %v29 = vld [vmem:[#allocation2] sm:$0xff]
    %v30 = vld [vmem:[#allocation2 + $0x8] sm:$0xff]
    %v31 = vld [vmem:[#allocation2 + $0x10] sm:$0xff]
    %v32 = vld [vmem:[#allocation2 + $0x18] sm:$0xff]
    %v33 = vld [vmem:[#allocation2 + $0x20] sm:$0xff]
    %v34 = vld [vmem:[#allocation2 + $0x28] sm:$0xff]
    %v35 = vld [vmem:[#allocation2 + $0x30] sm:$0xff]
    %v36 = vld [vmem:[#allocation2 + $0x38] sm:$0xff]
    %v37 = vld [vmem:[#allocation2 + $0x40] sm:$0xff]
    %v38 = vld [vmem:[#allocation2 + $0x48] sm:$0xff]
    %v39 = vld [vmem:[#allocation2 + $0x50] sm:$0xff]
    %v40 = vld [vmem:[#allocation2 + $0x58] sm:$0xff]
    %v41 = vld [vmem:[#allocation2 + $0x60] sm:$0xff]
    %v42 = vld [vmem:[#allocation2 + $0x68] sm:$0xff]
    %v43 = vld [vmem:[#allocation2 + $0x70] sm:$0xff]
    %v44 = vld [vmem:[#allocation2 + $0x78] sm:$0xff]
    %v45 = vld [vmem:[#allocation5] sm:$0xff]
    %v46 = vld [vmem:[#allocation5 + $0x8] sm:$0xff]
    %v47 = vadd.f32 %v29, %v31
    %v48 = vadd.f32 %v47, %v33
    %v49 = vadd.f32 %v48, %v35
    %v50 = vadd.f32 %v49, %v37
    %v51 = vadd.f32 %v50, %v39
    %v52 = vadd.f32 %v51, %v41
    %v53 = vadd.f32 %v52, %v43
    %v54 = vadd.f32 %v30, %v32
    %v55 = vadd.f32 %v54, %v34
    %v56 = vadd.f32 %v55, %v36
    %v57 = vadd.f32 %v56, %v38
    %v58 = vadd.f32 %v57, %v40
    %v59 = vadd.f32 %v58, %v42
    %v60 = vadd.f32 %v59, %v44
    %v61 = vadd.f32 %v45, %v53
    %v62 = vadd.f32 %v46, %v60
    %63 = vst [vmem:[#allocation5] sm:$0xff] %v61
    %64 = vst [vmem:[#allocation5 + $0x8] sm:$0xff] %v62
    // Predicated region
    $region14: #{tpu_custom_call.1} parent=1 // pred_check
      %p65 = pneg %p23
    $region15: #{tpu_custom_call.1} parent=1 // pred_check_branch
      %67 = sbr.rel (%p65) target = $region17
    $region16: #{tpu_custom_call.1} parent=1 // pred_region
      %v68 = vld [vmem:[#allocation5] sm:$0xff]
      %v69 = vld [vmem:[#allocation5 + $0x8] sm:$0xff]
      %v70 = vmul.f32 %v68, 0.125
      %v71 = vmul.f32 %v69, 0.125
      %72 = vst [vmem:[#allocation5] sm:$0xff] %v70
      %73 = vst [vmem:[#allocation5 + $0x8] sm:$0xff] %v71
    $region17: #{tpu_custom_call.1} parent=1 // pred_fallthru
      _
    // Predicated region
    $region18: #{tpu_custom_call.1} parent=1 // pred_check
      _
    $region19: #{tpu_custom_call.1} parent=1 // pred_check_branch
      %75 = sbr.rel (0) target = $region21
    $region20: #{tpu_custom_call.1} parent=1 // pred_region
      %s77 = ssub.s32 256, 256
      %78 = vsyncadd [#allocation4], %s77
      %s79 = sshll.u32 [#allocation5], 4
      %s80 = int_to_ptr.vmem [resolvable:$true] %s79
      %85 = dma.vmem_to_hbm [thread:$0]  %s80, 256, %s1, [#allocation4], 128, 128, 8
    $region21: #{tpu_custom_call.1} parent=1 // pred_fallthru
      _
    // Predicated region
    $region22: #{tpu_custom_call.1} parent=1 // pred_check
      _
    $region23: #{tpu_custom_call.1} parent=1 // pred_check_branch
      %87 = sbr.rel (0) target = $region25
    $region24: #{tpu_custom_call.1} parent=1 // pred_region
      %88 = dma.done [#allocation4], 256
    $region25: #{tpu_custom_call.1} parent=1 // pred_fallthru
      _
    %89 = vsyncpa [#allocation3], 1
    %90 = vsyncpa [#allocation4], 1

</llo_original>
